<compile_context>
chip_gen: v7x
topology: tpu7x:2x2x1
jax: 0.10.0
libtpu: 0.0.40
codegen_flags: <defaults>
</compile_context>

<pallas_src>
import functools

import jax
import jax.numpy as jnp
from jax.experimental import pallas as pl
from jax.experimental.pallas import tpu as pltpu

_LANE = 128
_MAX_ROW_BLOCK = 128          # keeps the Gram matmuls within one MXU tile
_MAX_COL_TILE = 128 * 1024    # lanes; keeps per-grid-step HBM bytes large


def _vmem_capacity_bytes():
    """Per-core VMEM capacity with a generation-aware fallback."""
    try:
        info = pltpu.get_tpu_info()
        cap = int(getattr(info, "vmem_capacity_bytes", 0))
        if cap > 0:
            return cap
    except Exception:
        pass
    try:
        kind = jax.devices()[0].device_kind.lower()
    except Exception:
        kind = ""
    if "v7" in kind:
        return 64 * 1024 * 1024
    if any(g in kind for g in ("v4", "v5", "v6")):
        return 128 * 1024 * 1024
    return 64 * 1024 * 1024


def _num_tensorcores():
    """Best-effort TensorCore count per device; conservative default of 1."""
    # TODO(synk): switch the partition axis to pltpu.CORE_PARALLEL once its
    # lowering is validated on v7x; "parallel" is used below as the portable
    # way to let the runtime shard grid axes across TensorCores.
    try:
        info = pltpu.get_tpu_info()
        for name in ("num_cores", "core_count", "num_tensorcores",
                     "tensorcore_count", "cores_per_chip", "num_cores_per_chip"):
            v = getattr(info, name, None)
            try:
                v = int(v)
            except (TypeError, ValueError):
                continue
            if v > 1:
                return min(v, 4)
    except Exception:
        pass
    return 1


def _dice_gram_kernel(x_ref, m_ref, out_ref, *, tiles_per_part, n_tiles, guard):
    """Grid = (partition, row_block, col_tile); the last axis is the reduction.

    Per (partition, row_block) the (1, 3, rb, rb) output block stays resident
    across the column-tile axis and is used directly as the accumulator for
    the three Gram matrices p@m.T, p@p.T, m@m.T (contraction over the spatial
    axis, f32 accumulation on the MXU).  Only their diagonals are consumed.
    """
    t = pl.program_id(2)

    @pl.when(t == 0)
    def _init():
        out_ref[...] = jnp.zeros_like(out_ref)

    def _accumulate():
        p = x_ref[...]                        # (rb, col_tile), caller dtype
        m = m_ref[...]
        dims = (((1,), (1,)), ((), ()))       # contract the spatial axis of both
        out_ref[0, 0, :, :] += jax.lax.dot_general(
            p, m, dims, preferred_element_type=jnp.float32)
        out_ref[0, 1, :, :] += jax.lax.dot_general(
            p, p, dims, preferred_element_type=jnp.float32)
        out_ref[0, 2, :, :] += jax.lax.dot_general(
            m, m, dims, preferred_element_type=jnp.float32)

    if guard:
        # Skip "phantom" steps that only exist because the column tiles do not
        # divide evenly across partitions (their clamped DMA re-reads a valid
        # tile; the compute is simply skipped).
        g = pl.program_id(0) * tiles_per_part + t
        pl.when(g < n_tiles)(_accumulate)
    else:
        _accumulate()


def dice_loss_multiclass(output, mask, *, col_tile=None):
    """Multi-class soft Dice loss for NCHW `output` / `mask` (float dtypes)."""
    if output.shape != mask.shape:
        raise ValueError("output and mask must have the same shape")
    N, C, H, W = output.shape
    rows, cols = N * C, H * W

    # Common floating dtype (the MXU needs matching operand dtypes).
    dtype = jnp.promote_types(output.dtype, mask.dtype)
    if not jnp.issubdtype(dtype, jnp.floating):
        dtype = jnp.float32
    x = output.reshape(rows, cols).astype(dtype)     # free reshape
    msk = mask.reshape(rows, cols).astype(dtype)
    itemsize = jnp.dtype(dtype).itemsize

    # Tiny-row corner (N*C < 8): pad to one sublane group so the Gram matmuls
    # see standard (>=8, K) operands.  Zero rows contribute nothing and their
    # diagonal entries are sliced away in the epilogue.
    rows_k = rows
    if rows < 8:
        pad = 8 - rows
        x = jnp.pad(x, ((0, pad), (0, 0)))
        msk = jnp.pad(msk, ((0, pad), (0, 0)))
        rows_k = 8

    vmem_cap = _vmem_capacity_bytes()

    # --- Row blocking: keeps M and N of the Gram matmuls <= one MXU tile. ---
    rb = rows_k if rows_k <= _MAX_ROW_BLOCK else _MAX_ROW_BLOCK
    n_rb = pl.cdiv(rows_k, rb)
    rows_padded = n_rb * rb

    # --- Column tile: biggest lane tile keeping the live blocks (2 inputs x
    # 2 buffers + the small resident Gram accumulators) within ~45% of VMEM.
    # Unlike the previous version there is no full-tile f32 upcast working
    # set to account for: the MXU consumes the input blocks directly.
    out_block_bytes = 2 * (3 * rb * rb * 4)
    budget = int(vmem_cap * 0.45) - out_block_bytes
    if cols < _LANE:
        col_tile = cols                              # single full-width tile
    else:
        lane_cols = (cols // _LANE) * _LANE
        max_tile = max(_LANE, (budget // (4 * rb * itemsize)) // _LANE * _LANE)
        if col_tile is None:
            col_tile = min(lane_cols, max_tile, _MAX_COL_TILE)
        else:
            col_tile = max(_LANE,
                           min((int(col_tile) // _LANE) * _LANE,
                               lane_cols, max_tile))

    n_tiles = cols // col_tile           # full tiles handled by the kernel
    tail = cols - n_tiles * col_tile     # ragged remainder -> jnp epilogue

    # --- Partition the column tiles across TensorCores (v7x / megacore);
    # stays 1 on single-TensorCore generations (v5e/v6e). --------------------
    cores = _num_tensorcores()
    parts = cores if (cores > 1 and n_tiles >= cores) else 1
    tiles_per_part = pl.cdiv(n_tiles, parts)
    guard = parts * tiles_per_part > n_tiles

    in_block_bytes = rb * col_tile * itemsize
    bs_kwargs = {}
    # Deeper prefetch queue only for thin blocks (2 inputs x 3 buffers of a
    # <=2 MiB block is a small fraction of the budget above).
    if tiles_per_part >= 4 and in_block_bytes <= (2 << 20):
        bs_kwargs["pipeline_mode"] = pl.Buffered(3)

    last_tile = n_tiles - 1

    def in_index_map(pi, ri, ti):
        g = pi * tiles_per_part + ti
        return (ri, jnp.minimum(g, last_tile))       # clamp phantom steps

    def out_index_map(pi, ri, ti):
        return (pi, 0, ri, 0)

    in_spec = pl.BlockSpec((rb, col_tile), in_index_map, **bs_kwargs)
    out_spec = pl.BlockSpec((1, 3, rb, rb), out_index_map)

    kernel = functools.partial(
        _dice_gram_kernel,
        tiles_per_part=tiles_per_part, n_tiles=n_tiles, guard=guard)

    grams = pl.pallas_call(
        kernel,
        out_shape=jax.ShapeDtypeStruct((parts, 3, rows_padded, rb), jnp.float32),
        grid_spec=pltpu.PrefetchScalarGridSpec(
            num_scalar_prefetch=0,
            grid=(parts, n_rb, tiles_per_part),
            in_specs=[in_spec, in_spec],
            out_specs=out_spec,
        ),
        compiler_params=pltpu.CompilerParams(
            dimension_semantics=("parallel", "parallel", "arbitrary"),
            vmem_limit_bytes=int(vmem_cap * 4 // 5),
        ),
    )(x, msk)

    # --- Epilogue: Gram diagonals + ragged-tail correction + dice/loss. -----
    g5 = grams.reshape(parts, 3, n_rb, rb, rb)
    diag = jnp.diagonal(g5, axis1=-2, axis2=-1)      # (parts, 3, n_rb, rb)
    sums = jnp.sum(diag, axis=0).reshape(3, rows_padded)[:, :rows]
    num, den1, den2 = sums[0], sums[1], sums[2]

    if tail:
        off = n_tiles * col_tile
        pt = x[:rows, off:].astype(jnp.float32)
        mt = msk[:rows, off:].astype(jnp.float32)
        num = num + jnp.sum(pt * mt, axis=1)
        den1 = den1 + jnp.sum(pt * pt, axis=1)
        den2 = den2 + jnp.sum(mt * mt, axis=1)

    eps = jnp.float32(1e-07)
    dice = 2.0 * (num + eps) / (den1 + den2 + eps)
    return jnp.float32(1.0) - jnp.sum(dice) / jnp.float32(N)


def _dice_loss_reference(output, mask):
    """Pure-JAX reference of the intended multi-class dice loss."""
    N = output.shape[0]
    eps = 1e-07
    p = output.astype(jnp.float32)
    m = mask.astype(jnp.float32)
    num = jnp.sum(p * m, axis=(2, 3))
    den1 = jnp.sum(p * p, axis=(2, 3))
    den2 = jnp.sum(m * m, axis=(2, 3))
    dice = 2.0 * (num + eps) / (den1 + den2 + eps)
    return 1.0 - jnp.sum(dice) / N


if __name__ == "__main__":
    key = jax.random.PRNGKey(0)
    k = jax.random.split(key, 8)

    def _check(loss, ref, tol, name):
        loss = jax.block_until_ready(loss)
        assert jnp.allclose(loss, ref, rtol=tol, atol=tol), (name, loss, ref)

    # f32 tolerance is set to cover MXU pass-precision for f32 matmuls
    # (DEFAULT precision); bf16 inputs match the f32 reference much tighter.

    # Case 1: f32, single-tile fast path, rows = 8.
    out1 = jax.random.uniform(k[0], (2, 4, 16, 16), dtype=jnp.float32)
    msk1 = (jax.random.uniform(k[1], (2, 4, 16, 16)) > 0.5).astype(jnp.float32)
    _check(dice_loss_multiclass(out1, msk1),
           _dice_loss_reference(out1, msk1), 3e-3, "case1")

    # Case 2: bf16, multi-tile pipeline (forced col_tile) + ragged tail +
    # Buffered(3) prefetch path.
    out2 = jax.random.uniform(k[2], (2, 4, 50, 50),
                              dtype=jnp.float32).astype(jnp.bfloat16)
    msk2 = (jax.random.uniform(k[3], (2, 4, 50, 50)) > 0.5).astype(jnp.bfloat16)
    _check(dice_loss_multiclass(out2, msk2, col_tile=256),
           _dice_loss_reference(out2, msk2), 1e-3, "case2")

    # Case 3: f32, N*C < 8 (tiny-row padding) + ragged spatial tail.
    out3 = jax.random.uniform(k[4], (1, 3, 20, 20), dtype=jnp.float32)
    msk3 = (jax.random.uniform(k[5], (1, 3, 20, 20)) > 0.5).astype(jnp.float32)
    _check(dice_loss_multiclass(out3, msk3),
           _dice_loss_reference(out3, msk3), 3e-3, "case3")

    # Case 4: f32, N*C = 132 > 128 -> multiple row blocks with a ragged
    # last row block (garbage rows discarded via the diagonal slice).
    out4 = jax.random.uniform(k[6], (6, 22, 16, 16), dtype=jnp.float32)
    msk4 = (jax.random.uniform(k[7], (6, 22, 16, 16)) > 0.5).astype(jnp.float32)
    _check(dice_loss_multiclass(out4, msk4),
           _dice_loss_reference(out4, msk4), 3e-3, "case4")

    print("KERNEL_OK")
</pallas_src>

<mosaic_0001>
module attributes {stable_mosaic.version = 11 : i64} {
  func.func @_dice_gram_kernel(%arg0: i32, %arg1: i32, %arg2: i32, %arg3: memref<8x256xf32, #tpu.memory_space<vmem>>, %arg4: memref<8x256xf32, #tpu.memory_space<vmem>>, %arg5: memref<1x3x8x8xf32, #tpu.memory_space<vmem>>) attributes {dimension_semantics = [#tpu.dimension_semantics<parallel>, #tpu.dimension_semantics<parallel>, #tpu.dimension_semantics<arbitrary>], iteration_bounds = array<i64: 1, 1, 1>, scalar_prefetch = 0 : i64, scratch_operands = 0 : i64, tpu.core_type = #tpu.core_type<tc>, window_params = [{transform_indices = @transform_0, window_bounds = array<i64: 8, 256>}, {transform_indices = @transform_1, window_bounds = array<i64: 8, 256>}, {transform_indices = @transform_2, window_bounds = array<i64: 1, 3, 8, 8>}]} {
    %c0_i32 = arith.constant 0 : i32
    %0 = arith.cmpi eq, %arg2, %c0_i32 : i32
    %1 = arith.extui %0 : i1 to i32
    %c0_i32_0 = arith.constant 0 : i32
    %2 = arith.cmpi ne, %1, %c0_i32_0 : i32
    scf.if %2 {
      %cst_28 = arith.constant 0.000000e+00 : f32
      %26 = vector.broadcast %cst_28 : f32 to vector<1x3x8x8xf32>
      %c0_29 = arith.constant 0 : index
      %c0_30 = arith.constant 0 : index
      %c0_31 = arith.constant 0 : index
      %c0_32 = arith.constant 0 : index
      %27 = vector.load %arg5[%c0_29, %c0_30, %c0_31, %c0_32] : memref<1x3x8x8xf32, #tpu.memory_space<vmem>>, vector<1x3x8x8xf32>
      tpu.vector_store %arg5[%c0_29, %c0_30, %c0_31, %c0_32], %26 {strides = array<i32>} : memref<1x3x8x8xf32, #tpu.memory_space<vmem>>, vector<1x3x8x8xf32>,
    } else {
    }
    %c0 = arith.constant 0 : index
    %c0_1 = arith.constant 0 : index
    %3 = vector.load %arg3[%c0, %c0_1] : memref<8x256xf32, #tpu.memory_space<vmem>>, vector<8x256xf32>
    %c0_2 = arith.constant 0 : index
    %c0_3 = arith.constant 0 : index
    %4 = vector.load %arg4[%c0_2, %c0_3] : memref<8x256xf32, #tpu.memory_space<vmem>>, vector<8x256xf32>
    %c0_4 = arith.constant 0 : index
    %c0_5 = arith.constant 0 : index
    %c0_6 = arith.constant 0 : index
    %c0_7 = arith.constant 0 : index
    %5 = vector.load %arg5[%c0_4, %c0_5, %c0_6, %c0_7] : memref<1x3x8x8xf32, #tpu.memory_space<vmem>>, vector<1x1x8x8xf32>
    %6 = vector.shape_cast %5 : vector<1x1x8x8xf32> to vector<8x8xf32>
    %cst = arith.constant dense<0.000000e+00> : vector<8x8xf32>
    %7 = tpu.matmul %3, %4, %cst {dimension_numbers = #tpu.dot_dimension_numbers<[1], [1], [0], [0], [0, 0, 1, 0], [], []>} : vector<8x256xf32>, vector<8x256xf32>, vector<8x8xf32> -> vector<8x8xf32>
    %8 = arith.addf %6, %7 : vector<8x8xf32>
    %c0_8 = arith.constant 0 : index
    %c0_9 = arith.constant 0 : index
    %c0_10 = arith.constant 0 : index
    %c0_11 = arith.constant 0 : index
    %9 = vector.load %arg5[%c0_8, %c0_9, %c0_10, %c0_11] : memref<1x3x8x8xf32, #tpu.memory_space<vmem>>, vector<1x1x8x8xf32>
    %10 = vector.shape_cast %9 : vector<1x1x8x8xf32> to vector<8x8xf32>
    %11 = vector.shape_cast %8 : vector<8x8xf32> to vector<1x1x8x8xf32>
    tpu.vector_store %arg5[%c0_8, %c0_9, %c0_10, %c0_11], %11 {strides = array<i32>} : memref<1x3x8x8xf32, #tpu.memory_space<vmem>>, vector<1x1x8x8xf32>,
    %c0_12 = arith.constant 0 : index
    %c1 = arith.constant 1 : index
    %c0_13 = arith.constant 0 : index
    %c0_14 = arith.constant 0 : index
    %12 = vector.load %arg5[%c0_12, %c1, %c0_13, %c0_14] : memref<1x3x8x8xf32, #tpu.memory_space<vmem>>, vector<1x1x8x8xf32>
    %13 = vector.shape_cast %12 : vector<1x1x8x8xf32> to vector<8x8xf32>
    %cst_15 = arith.constant dense<0.000000e+00> : vector<8x8xf32>
    %14 = tpu.matmul %3, %3, %cst_15 {dimension_numbers = #tpu.dot_dimension_numbers<[1], [1], [0], [0], [0, 0, 1, 0], [], []>} : vector<8x256xf32>, vector<8x256xf32>, vector<8x8xf32> -> vector<8x8xf32>
    %15 = arith.addf %13, %14 : vector<8x8xf32>
    %c0_16 = arith.constant 0 : index
    %c1_17 = arith.constant 1 : index
    %c0_18 = arith.constant 0 : index
    %c0_19 = arith.constant 0 : index
    %16 = vector.load %arg5[%c0_16, %c1_17, %c0_18, %c0_19] : memref<1x3x8x8xf32, #tpu.memory_space<vmem>>, vector<1x1x8x8xf32>
    %17 = vector.shape_cast %16 : vector<1x1x8x8xf32> to vector<8x8xf32>
    %18 = vector.shape_cast %15 : vector<8x8xf32> to vector<1x1x8x8xf32>
    tpu.vector_store %arg5[%c0_16, %c1_17, %c0_18, %c0_19], %18 {strides = array<i32>} : memref<1x3x8x8xf32, #tpu.memory_space<vmem>>, vector<1x1x8x8xf32>,
    %c0_20 = arith.constant 0 : index
    %c2 = arith.constant 2 : index
    %c0_21 = arith.constant 0 : index
    %c0_22 = arith.constant 0 : index
    %19 = vector.load %arg5[%c0_20, %c2, %c0_21, %c0_22] : memref<1x3x8x8xf32, #tpu.memory_space<vmem>>, vector<1x1x8x8xf32>
    %20 = vector.shape_cast %19 : vector<1x1x8x8xf32> to vector<8x8xf32>
    %cst_23 = arith.constant dense<0.000000e+00> : vector<8x8xf32>
    %21 = tpu.matmul %4, %4, %cst_23 {dimension_numbers = #tpu.dot_dimension_numbers<[1], [1], [0], [0], [0, 0, 1, 0], [], []>} : vector<8x256xf32>, vector<8x256xf32>, vector<8x8xf32> -> vector<8x8xf32>
    %22 = arith.addf %20, %21 : vector<8x8xf32>
    %c0_24 = arith.constant 0 : index
    %c2_25 = arith.constant 2 : index
    %c0_26 = arith.constant 0 : index
    %c0_27 = arith.constant 0 : index
    %23 = vector.load %arg5[%c0_24, %c2_25, %c0_26, %c0_27] : memref<1x3x8x8xf32, #tpu.memory_space<vmem>>, vector<1x1x8x8xf32>
    %24 = vector.shape_cast %23 : vector<1x1x8x8xf32> to vector<8x8xf32>
    %25 = vector.shape_cast %22 : vector<8x8xf32> to vector<1x1x8x8xf32>
    tpu.vector_store %arg5[%c0_24, %c2_25, %c0_26, %c0_27], %25 {strides = array<i32>} : memref<1x3x8x8xf32, #tpu.memory_space<vmem>>, vector<1x1x8x8xf32>,
    return
  }
  func.func @transform_0(%arg0: i32, %arg1: i32, %arg2: i32) -> (i32, i32) {
    %c1_i32 = arith.constant 1 : i32
    %0 = arith.muli %arg0, %c1_i32 : i32
    %1 = arith.addi %0, %arg2 : i32
    %c0_i32 = arith.constant 0 : i32
    %2 = arith.minsi %1, %c0_i32 : i32
    %c0_i32_0 = arith.constant 0 : i32
    return %arg1, %2 : i32, i32
  }
  func.func @transform_1(%arg0: i32, %arg1: i32, %arg2: i32) -> (i32, i32) {
    %c1_i32 = arith.constant 1 : i32
    %0 = arith.muli %arg0, %c1_i32 : i32
    %1 = arith.addi %0, %arg2 : i32
    %c0_i32 = arith.constant 0 : i32
    %2 = arith.minsi %1, %c0_i32 : i32
    %c0_i32_0 = arith.constant 0 : i32
    return %arg1, %2 : i32, i32
  }
  func.func @transform_2(%arg0: i32, %arg1: i32, %arg2: i32) -> (i32, i32, i32, i32) {
    %c0_i32 = arith.constant 0 : i32
    %c0_i32_0 = arith.constant 0 : i32
    %c0_i32_1 = arith.constant 0 : i32
    return %arg0, %c0_i32, %arg1, %c0_i32_0 : i32, i32, i32, i32
  }
}

</mosaic_0001>

<llo_original>
// kernel: tpu_custom_call.1
$region0: #{tpu_custom_call.1}
  #allocation0 [shape = 'u32[]', space=smem, size = 0x4, offset = 0x4, fixed_abs, tag = 'smem constant byte address 0x4 - core index']
  #allocation1 [shape = 'u32[144,128]{1,0:T(1,128)}', space=vmem, size = 0x12000, scoped, tag = 'internal scratch']
  %s0 = inlined_call_operand.hbm [shape: f32[8,256], index: 0, kind: input, shape index: {}]
  %s1 = inlined_call_operand.hbm [shape: f32[8,256], index: 1, kind: input, shape index: {}]
  %s2 = inlined_call_operand.hbm [shape: f32[1,3,8,8], index: 2, kind: output, shape index: {}]
  %s3 = sld [smem:[#allocation0]]
  $region30: #{tpu_custom_call.1} parent=0
    _
  %s5 = ssub.s32 1, %s3
  %s6 = scalar_select 0, %s5, %s3
  $region1: #{tpu_custom_call.1} parent=0
    #allocation2 [shape = 'u8[8192]{0}', space=vmem, size = 0x2000, scoped, tag = 'input window, operand 0, single buffered']
    #allocation3 [shape = 's32[1]{0}', space=sflag, size = 0x4, scoped, tag = 'scoped memory for tpu_custom_call.1']
    #allocation4 [shape = 's32[1]{0}', space=sflag, size = 0x4, scoped, tag = 'scoped memory for tpu_custom_call.1']
    #allocation5 [shape = 'u8[8192]{0}', space=vmem, size = 0x2000, scoped, tag = 'input window, operand 1, single buffered']
    #allocation6 [shape = 's32[1]{0}', space=sflag, size = 0x4, scoped, tag = 'scoped memory for tpu_custom_call.1']
    #allocation7 [shape = 'u8[12288]{0}', space=vmem, size = 0x3000, scoped, tag = 'output window, operand 0, single buffered']
    %7 = vsyncpa [#allocation3], 0
    %8 = vsyncpa [#allocation6], 0
    %9 = vsyncpa [#allocation4], 0
    // Predicated region
    $region2: #{tpu_custom_call.1} parent=1 // pred_check
      _
    $region3: #{tpu_custom_call.1} parent=1 // pred_check_branch
      %11 = sbr.rel (0) target = $region5
    $region4: #{tpu_custom_call.1} parent=1 // pred_region
      %s12 = sadd.s32 0, 0
      %p13 = scmp.lt.s32.totalorder %s12, 0
      %s14 = scalar_select %p13, %s12, 0
      %s15 = smul.u32 2, %s14
      %s17 = ssub.s32 256, 256
      %18 = vsyncadd [#allocation3], %s17
      %s19 = smul.addr %s15, 128
      %s20 = scalar_lea.hbm %s0, %s19
      %s22 = sshll.u32 [#allocation2], 4
      %s23 = int_to_ptr.vmem [resolvable:$true] %s22
      %25 = dma.hbm_to_vmem [thread:$0]  %s20, 256, %s23, [#allocation3]
    $region5: #{tpu_custom_call.1} parent=1 // pred_fallthru
      _
    // Predicated region
    $region6: #{tpu_custom_call.1} parent=1 // pred_check
      _
    $region7: #{tpu_custom_call.1} parent=1 // pred_check_branch
      %27 = sbr.rel (0) target = $region9
    $region8: #{tpu_custom_call.1} parent=1 // pred_region
      %s28 = sadd.s32 0, 0
      %p29 = scmp.lt.s32.totalorder %s28, 0
      %s30 = scalar_select %p29, %s28, 0
      %s31 = smul.u32 2, %s30
      %s33 = ssub.s32 256, 256
      %34 = vsyncadd [#allocation6], %s33
      %s35 = smul.addr %s31, 128
      %s36 = scalar_lea.hbm %s1, %s35
      %s38 = sshll.u32 [#allocation5], 4
      %s39 = int_to_ptr.vmem [resolvable:$true] %s38
      %41 = dma.hbm_to_vmem [thread:$0]  %s36, 256, %s39, [#allocation6]
    $region9: #{tpu_custom_call.1} parent=1 // pred_fallthru
      _
    // Predicated region
    $region10: #{tpu_custom_call.1} parent=1 // pred_check
      _
    $region11: #{tpu_custom_call.1} parent=1 // pred_check_branch
      %43 = sbr.rel (0) target = $region13
    $region12: #{tpu_custom_call.1} parent=1 // pred_region
      %44 = dma.done [#allocation3], 256
    $region13: #{tpu_custom_call.1} parent=1 // pred_fallthru
      _
    // Predicated region
    $region14: #{tpu_custom_call.1} parent=1 // pred_check
      _
    $region15: #{tpu_custom_call.1} parent=1 // pred_check_branch
      %46 = sbr.rel (0) target = $region17
    $region16: #{tpu_custom_call.1} parent=1 // pred_region
      %47 = dma.done [#allocation6], 256
    $region17: #{tpu_custom_call.1} parent=1 // pred_fallthru
      _
    %s48 = sadd.s32 0, 0
    %p49 = scmp.lt.s32.totalorder %s48, 0
    %s50 = scalar_select %p49, %s48, 0
    %s51 = smul.u32 2, %s50
    %s52 = sadd.s32 0, 0
    %p53 = scmp.lt.s32.totalorder %s52, 0
    %s54 = scalar_select %p53, %s52, 0
    %s55 = smul.u32 2, %s54
    %p56 = scmp.eq.s32.totalorder 0, 0
    // Predicated region
    $region18: #{tpu_custom_call.1} parent=1 // pred_check
      %p57 = pneg %p56
    $region19: #{tpu_custom_call.1} parent=1 // pred_check_branch
      %59 = sbr.rel (%p57) target = $region21
    $region20: #{tpu_custom_call.1} parent=1 // pred_region
      %vm60 = vcmask 64512
      %61 = vst.msk [vmem:[#allocation7] sm:$0xff] %vm60, 0.0
      %62 = vst.msk [vmem:[#allocation7 + $0x8] sm:$0xff] %vm60, 0.0
      %63 = vst.msk [vmem:[#allocation7 + $0x10] sm:$0xff] %vm60, 0.0
    $region21: #{tpu_custom_call.1} parent=1 // pred_fallthru
      _
    %v64 = vld [vmem:[#allocation2] sm:$0xff]
    %v65 = vld [vmem:[#allocation2 + $0x8] sm:$0xff]
    %v66 = vld [vmem:[#allocation5] sm:$0xff]
    %v67 = vld [vmem:[#allocation5 + $0x8] sm:$0xff]
    %v68 = vld [vmem:[#allocation7] sm:$0xff]
    %69 = vmatprep.subr.mxu0 %v67
    %70 = vmatpush1.xpose.msra.mxu0 %v66
    %71 = vmatprep.subr.mxu0 0.0
    %72 = vmatpush1.xpose.msra.mxu0 0.0
    %73 = vmatprep.subr.mxu0 0.0
    %74 = vmatpush1.xpose.msra.mxu0 0.0
    %75 = vmatprep.subr.mxu0 0.0
    %76 = vmatpush1.xpose.msra.mxu0 0.0
    %77 = vmatprep.subr.mxu0 0.0
    %78 = vmatpush1.xpose.msra.mxu0 0.0
    %79 = vmatprep.subr.mxu0 0.0
    %80 = vmatpush1.xpose.msra.mxu0 0.0
    %81 = vmatprep.subr.mxu0 0.0
    %82 = vmatpush1.xpose.msra.mxu0 0.0
    %83 = vmatprep.subr.mxu0 0.0
    %84 = vmatpush1.xpose.msra.mxu0 0.0
    %85 = vmatprep.subr.mxu0 0.0
    %86 = vmatpush1.xpose.msra.mxu0 0.0
    %87 = vmatprep.subr.mxu0 0.0
    %88 = vmatpush1.xpose.msra.mxu0 0.0
    %89 = vmatprep.subr.mxu0 0.0
    %90 = vmatpush1.xpose.msra.mxu0 0.0
    %91 = vmatprep.subr.mxu0 0.0
    %92 = vmatpush1.xpose.msra.mxu0 0.0
    %93 = vmatprep.subr.mxu0 0.0
    %94 = vmatpush1.xpose.msra.mxu0 0.0
    %95 = vmatprep.subr.mxu0 0.0
    %96 = vmatpush1.xpose.msra.mxu0 0.0
    %97 = vmatprep.subr.mxu0 0.0
    %98 = vmatpush1.xpose.msra.mxu0 0.0
    %99 = vmatprep.subr.mxu0 0.0
    %100 = vmatpush1.xpose.msra.mxu0 0.0
    %101 = vmatprep.subr.mxu0 0.0
    %102 = vmatpush1.xpose.msra.mxu0 0.0
    %103 = vmatprep.subr.mxu0 0.0
    %104 = vmatpush1.xpose.msra.mxu0 0.0
    %105 = vmatprep.subr.mxu0 0.0
    %106 = vmatpush1.xpose.msra.mxu0 0.0
    %107 = vmatprep.subr.mxu0 0.0
    %108 = vmatpush1.xpose.msra.mxu0 0.0
    %109 = vmatprep.subr.mxu0 0.0
    %110 = vmatpush1.xpose.msra.mxu0 0.0
    %111 = vmatprep.subr.mxu0 0.0
    %112 = vmatpush1.xpose.msra.mxu0 0.0
    %113 = vmatprep.subr.mxu0 0.0
    %114 = vmatpush1.xpose.msra.mxu0 0.0
    %115 = vmatprep.subr.mxu0 0.0
    %116 = vmatpush1.xpose.msra.mxu0 0.0
    %117 = vmatprep.subr.mxu0 0.0
    %118 = vmatpush1.xpose.msra.mxu0 0.0
    %119 = vmatprep.subr.mxu0 0.0
    %120 = vmatpush1.xpose.msra.mxu0 0.0
    %121 = vmatprep.subr.mxu0 0.0
    %122 = vmatpush1.xpose.msra.mxu0 0.0
    %123 = vmatprep.subr.mxu0 0.0
    %124 = vmatpush1.xpose.msra.mxu0 0.0
    %125 = vmatprep.subr.mxu0 0.0
    %126 = vmatpush1.xpose.msra.mxu0 0.0
    %127 = vmatprep.subr.mxu0 0.0
    %128 = vmatpush1.xpose.msra.mxu0 0.0
    %129 = vmatprep.subr.mxu0 0.0
    %130 = vmatpush1.xpose.msra.mxu0 0.0
    %131 = vmatprep.subr.mxu0 0.0
    %132 = vmatpush1.xpose.msra.mxu0 0.0
    %133 = vmatprep.mubr.f32.mxu0 %v65
    %134 = vmatmul.mubr.f32.gmra.mrb[0].mxu0 %v64
    %v135 = vpop.f32.mrb[0].mxu0
    %v136 = vadd.f32 0.0, %v135
    %v137 = vpop.f32.mrb[0].mxu0
    %138 = vdwg.mxu0
    %v139 = vadd.f32 %v68, %v136
    %vm140 = vcmask 64512
    %141 = vst.msk [vmem:[#allocation7] sm:$0xff] %vm140, %v139
    %s142 = scalar_lea.vmem [#allocation7], 8
    %v143 = vld [vmem:[%s142] sm:$0xff]
    %144 = vmatprep.subr.mxu0 %v65
    %145 = vmatpush1.xpose.msra.mxu0 %v64
    %146 = vmatprep.subr.mxu0 0.0
    %147 = vmatpush1.xpose.msra.mxu0 0.0
    %148 = vmatprep.subr.mxu0 0.0
    %149 = vmatpush1.xpose.msra.mxu0 0.0
    %150 = vmatprep.subr.mxu0 0.0
    %151 = vmatpush1.xpose.msra.mxu0 0.0
    %152 = vmatprep.subr.mxu0 0.0
    %153 = vmatpush1.xpose.msra.mxu0 0.0
    %154 = vmatprep.subr.mxu0 0.0
    %155 = vmatpush1.xpose.msra.mxu0 0.0
    %156 = vmatprep.subr.mxu0 0.0
    %157 = vmatpush1.xpose.msra.mxu0 0.0
    %158 = vmatprep.subr.mxu0 0.0
    %159 = vmatpush1.xpose.msra.mxu0 0.0
    %160 = vmatprep.subr.mxu0 0.0
    %161 = vmatpush1.xpose.msra.mxu0 0.0
    %162 = vmatprep.subr.mxu0 0.0
    %163 = vmatpush1.xpose.msra.mxu0 0.0
    %164 = vmatprep.subr.mxu0 0.0
    %165 = vmatpush1.xpose.msra.mxu0 0.0
    %166 = vmatprep.subr.mxu0 0.0
    %167 = vmatpush1.xpose.msra.mxu0 0.0
    %168 = vmatprep.subr.mxu0 0.0
    %169 = vmatpush1.xpose.msra.mxu0 0.0
    %170 = vmatprep.subr.mxu0 0.0
    %171 = vmatpush1.xpose.msra.mxu0 0.0
    %172 = vmatprep.subr.mxu0 0.0
    %173 = vmatpush1.xpose.msra.mxu0 0.0
    %174 = vmatprep.subr.mxu0 0.0
    %175 = vmatpush1.xpose.msra.mxu0 0.0
    %176 = vmatprep.subr.mxu0 0.0
    %177 = vmatpush1.xpose.msra.mxu0 0.0
    %178 = vmatprep.subr.mxu0 0.0
    %179 = vmatpush1.xpose.msra.mxu0 0.0
    %180 = vmatprep.subr.mxu0 0.0
    %181 = vmatpush1.xpose.msra.mxu0 0.0
    %182 = vmatprep.subr.mxu0 0.0
    %183 = vmatpush1.xpose.msra.mxu0 0.0
    %184 = vmatprep.subr.mxu0 0.0
    %185 = vmatpush1.xpose.msra.mxu0 0.0
    %186 = vmatprep.subr.mxu0 0.0
    %187 = vmatpush1.xpose.msra.mxu0 0.0
    %188 = vmatprep.subr.mxu0 0.0
    %189 = vmatpush1.xpose.msra.mxu0 0.0
    %190 = vmatprep.subr.mxu0 0.0
    %191 = vmatpush1.xpose.msra.mxu0 0.0
    %192 = vmatprep.subr.mxu0 0.0
    %193 = vmatpush1.xpose.msra.mxu0 0.0
    %194 = vmatprep.subr.mxu0 0.0
    %195 = vmatpush1.xpose.msra.mxu0 0.0
    %196 = vmatprep.subr.mxu0 0.0
    %197 = vmatpush1.xpose.msra.mxu0 0.0
    %198 = vmatprep.subr.mxu0 0.0
    %199 = vmatpush1.xpose.msra.mxu0 0.0
    %200 = vmatprep.subr.mxu0 0.0
    %201 = vmatpush1.xpose.msra.mxu0 0.0
    %202 = vmatprep.subr.mxu0 0.0
    %203 = vmatpush1.xpose.msra.mxu0 0.0
    %204 = vmatprep.subr.mxu0 0.0
    %205 = vmatpush1.xpose.msra.mxu0 0.0
    %206 = vmatprep.subr.mxu0 0.0
    %207 = vmatpush1.xpose.msra.mxu0 0.0
    %208 = vmatprep.mubr.f32.mxu0 %v65
    %209 = vmatmul.mubr.f32.gmra.mrb[0].mxu0 %v64
    %v210 = vpop.f32.mrb[0].mxu0
    %v211 = vadd.f32 0.0, %v210
    %v212 = vpop.f32.mrb[0].mxu0
    %213 = vdwg.mxu0
    %v214 = vadd.f32 %v143, %v211
    %215 = vst.msk [vmem:[%s142] sm:$0xff] %vm140, %v214
    %s216 = scalar_lea.vmem [#allocation7], 16
    %v217 = vld [vmem:[%s216] sm:$0xff]
    %218 = vmatprep.subr.mxu0 %v67
    %219 = vmatpush1.xpose.msra.mxu0 %v66
    %220 = vmatprep.subr.mxu0 0.0
    %221 = vmatpush1.xpose.msra.mxu0 0.0
    %222 = vmatprep.subr.mxu0 0.0
    %223 = vmatpush1.xpose.msra.mxu0 0.0
    %224 = vmatprep.subr.mxu0 0.0
    %225 = vmatpush1.xpose.msra.mxu0 0.0
    %226 = vmatprep.subr.mxu0 0.0
    %227 = vmatpush1.xpose.msra.mxu0 0.0
    %228 = vmatprep.subr.mxu0 0.0
    %229 = vmatpush1.xpose.msra.mxu0 0.0
    %230 = vmatprep.subr.mxu0 0.0
    %231 = vmatpush1.xpose.msra.mxu0 0.0
    %232 = vmatprep.subr.mxu0 0.0
    %233 = vmatpush1.xpose.msra.mxu0 0.0
    %234 = vmatprep.subr.mxu0 0.0
    %235 = vmatpush1.xpose.msra.mxu0 0.0
    %236 = vmatprep.subr.mxu0 0.0
    %237 = vmatpush1.xpose.msra.mxu0 0.0
    %238 = vmatprep.subr.mxu0 0.0
    %239 = vmatpush1.xpose.msra.mxu0 0.0
    %240 = vmatprep.subr.mxu0 0.0
    %241 = vmatpush1.xpose.msra.mxu0 0.0
    %242 = vmatprep.subr.mxu0 0.0
    %243 = vmatpush1.xpose.msra.mxu0 0.0
    %244 = vmatprep.subr.mxu0 0.0
    %245 = vmatpush1.xpose.msra.mxu0 0.0
    %246 = vmatprep.subr.mxu0 0.0
    %247 = vmatpush1.xpose.msra.mxu0 0.0
    %248 = vmatprep.subr.mxu0 0.0
    %249 = vmatpush1.xpose.msra.mxu0 0.0
    %250 = vmatprep.subr.mxu0 0.0
    %251 = vmatpush1.xpose.msra.mxu0 0.0
    %252 = vmatprep.subr.mxu0 0.0
    %253 = vmatpush1.xpose.msra.mxu0 0.0
    %254 = vmatprep.subr.mxu0 0.0
    %255 = vmatpush1.xpose.msra.mxu0 0.0
    %256 = vmatprep.subr.mxu0 0.0
    %257 = vmatpush1.xpose.msra.mxu0 0.0
    %258 = vmatprep.subr.mxu0 0.0
    %259 = vmatpush1.xpose.msra.mxu0 0.0
    %260 = vmatprep.subr.mxu0 0.0
    %261 = vmatpush1.xpose.msra.mxu0 0.0
    %262 = vmatprep.subr.mxu0 0.0
    %263 = vmatpush1.xpose.msra.mxu0 0.0
    %264 = vmatprep.subr.mxu0 0.0
    %265 = vmatpush1.xpose.msra.mxu0 0.0
    %266 = vmatprep.subr.mxu0 0.0
    %267 = vmatpush1.xpose.msra.mxu0 0.0
    %268 = vmatprep.subr.mxu0 0.0
    %269 = vmatpush1.xpose.msra.mxu0 0.0
    %270 = vmatprep.subr.mxu0 0.0
    %271 = vmatpush1.xpose.msra.mxu0 0.0
    %272 = vmatprep.subr.mxu0 0.0
    %273 = vmatpush1.xpose.msra.mxu0 0.0
    %274 = vmatprep.subr.mxu0 0.0
    %275 = vmatpush1.xpose.msra.mxu0 0.0
    %276 = vmatprep.subr.mxu0 0.0
    %277 = vmatpush1.xpose.msra.mxu0 0.0
    %278 = vmatprep.subr.mxu0 0.0
    %279 = vmatpush1.xpose.msra.mxu0 0.0
    %280 = vmatprep.subr.mxu0 0.0
    %281 = vmatpush1.xpose.msra.mxu0 0.0
    %282 = vmatprep.mubr.f32.mxu0 %v67
    %283 = vmatmul.mubr.f32.gmra.mrb[0].mxu0 %v66
    %v284 = vpop.f32.mrb[0].mxu0
    %v285 = vadd.f32 0.0, %v284
    %v286 = vpop.f32.mrb[0].mxu0
    %287 = vdwg.mxu0
    %v288 = vadd.f32 %v217, %v285
    %289 = vst.msk [vmem:[%s216] sm:$0xff] %vm140, %v288
    // Predicated region
    $region22: #{tpu_custom_call.1} parent=1 // pred_check
      _
    $region23: #{tpu_custom_call.1} parent=1 // pred_check_branch
      %291 = sbr.rel (0) target = $region25
    $region24: #{tpu_custom_call.1} parent=1 // pred_region
      %s293 = ssub.s32 384, 384
      %294 = vsyncadd [#allocation4], %s293
      %s295 = sshll.u32 [#allocation7], 4
      %s296 = int_to_ptr.vmem [resolvable:$true] %s295
      %301 = dma.vmem_to_hbm [thread:$0]  %s296, 384, %s2, [#allocation4], 128, 128, 8
    $region25: #{tpu_custom_call.1} parent=1 // pred_fallthru
      _
    // Predicated region
    $region26: #{tpu_custom_call.1} parent=1 // pred_check
      _
    $region27: #{tpu_custom_call.1} parent=1 // pred_check_branch
      %303 = sbr.rel (0) target = $region29
    $region28: #{tpu_custom_call.1} parent=1 // pred_region
      %304 = dma.done [#allocation4], 384
    $region29: #{tpu_custom_call.1} parent=1 // pred_fallthru
      _
    %305 = vsyncpa [#allocation3], 1
    %306 = vsyncpa [#allocation6], 1
    %307 = vsyncpa [#allocation4], 1

</llo_original>
